<compile_context>
chip_gen: v7x
topology: tpu7x:2x2x1
jax: 0.10.0
libtpu: 0.0.40
codegen_flags: <defaults>
</compile_context>

<pallas_src>
import functools

import jax
import jax.numpy as jnp
from jax.experimental import pallas as pl
from jax.experimental.pallas import tpu as pltpu


def _round_up(v: int, m: int) -> int:
    return (v + m - 1) // m * m


def _vmem_capacity_bytes() -> int:
    """Per-core VMEM capacity; conservative (v7x-safe) fallback if unavailable."""
    try:
        info = pltpu.get_tpu_info()
        for name in ("vmem_capacity_bytes", "vmem_bytes", "vmem_size_bytes"):
            cap = getattr(info, name, None)
            if cap:
                return int(cap)
    except Exception:
        pass
    return 64 * 1024 * 1024


def _pick_tile(n: int, d: int, k_pad: int, *, x_bytes: int, mm_bytes: int,
               budget_bytes: int) -> int:
    """Largest token tile (multiple of 8, <= 1024) whose working set fits the
    generation-aware VMEM budget."""
    f32 = 4
    d_lane = _round_up(d, 128)   # lane padding of VMEM-resident (.., D) tiles
    d_sub = _round_up(d, 8)
    # loop-invariant operands, single-buffered (pl.Buffered(1))
    fixed = (k_pad * d_lane * mm_bytes        # emb (K_pad, D)        -- gather RHS
             + d_sub * k_pad * mm_bytes       # emb_score (D, K_pad)  -- score RHS
             + 8 * k_pad * f32)               # ||e||^2 (1, K_pad), sublane-padded
    per_row = (
        2 * d_lane * x_bytes                  # x input tile, double-buffered
        + 2 * d_lane * x_bytes                # quant output tile (native dtype)
        + 2 * 128 * 4                         # idx (TN,1) column tile, lane-padded
        + 6 * k_pad * f32                     # score/iota/where/one_hot/cmp temps
        + 3 * d_lane * f32)                   # f32 casts: x, quant, diff
    avail = max(budget_bytes - fixed, 8 * per_row)
    tn = min(1024, _round_up(n, 8), max(8, (avail // per_row) // 8 * 8))
    return max(8, tn)


def _quantizer_kernel(x_ref, emb_ref, escore_ref, esq_ref,
                      quant_ref, idx_ref, loss_ref,
                      *, tn, n_valid, mask_rows, mm_dtype):
    x_in = x_ref[...]                                  # (TN, D) native dtype
    xm = x_in.astype(mm_dtype)

    # Nearest-code score: ||e||^2 - 2 x.e.  The per-row ||x||^2 term is dropped
    # (argmin-invariant); -2 and the transpose are folded into escore = (-2 e)^T.
    xe = jnp.dot(xm, escore_ref[...],
                 preferred_element_type=jnp.float32)   # (TN, K_pad) on the MXU
    score = esq_ref[...] + xe                          # (TN, K_pad) f32

    k_pad = score.shape[-1]
    # argmin over the codebook axis (first occurrence on ties, like torch.argmin)
    min_s = jnp.min(score, axis=-1, keepdims=True)     # (TN, 1)
    iota_k = jax.lax.broadcasted_iota(jnp.int32, score.shape, 1)
    idx = jnp.min(jnp.where(score == min_s, iota_k, k_pad),
                  axis=-1, keepdims=True)              # (TN, 1) int32
    idx_ref[...] = idx

    # gather selected codes via one-hot matmul (exact: 0/1 weights)
    one_hot = (iota_k == idx).astype(mm_dtype)         # (TN, K_pad)
    quant = jnp.dot(one_hot, emb_ref[...],
                    preferred_element_type=jnp.float32)  # (TN, D) f32
    quant_ref[...] = quant.astype(quant_ref.dtype)

    # per-tile partial sum of squared error (diff-based for numerics)
    diff = quant - x_in.astype(jnp.float32)            # (TN, D) f32
    loss_ref[...] = jnp.broadcast_to(jnp.sum(diff * diff), loss_ref.shape)
    if mask_rows:
        # only the final tile contains out-of-range rows; mask them there only
        @pl.when(pl.program_id(0) == pl.num_programs(0) - 1)
        def _():
            row = (jax.lax.broadcasted_iota(jnp.int32, (tn, 1), 0)
                   + pl.program_id(0) * tn)
            dmask = jnp.where(row < n_valid, diff, 0.0)
            loss_ref[...] = jnp.broadcast_to(jnp.sum(dmask * dmask),
                                             loss_ref.shape)


@functools.partial(jax.jit, static_argnames=("beta",))
def quantizer_forward(x, embedding_weight, beta=0.25):
    """Pallas implementation of Quantizer.forward.

    x: (B, C, D); embedding_weight: (K, D)
    returns: (quant_out (B,C,D) in x.dtype, quantize_loss scalar, indices (B,C) int32)
    """
    B, C, D = x.shape
    K, Dw = embedding_weight.shape
    assert D == Dw
    N = B * C
    K_pad = _round_up(K, 256)   # 256-wide K for v6e/v7x MXU tiles (harmless on v5e)

    # bf16 MXU path only when x itself is bf16; f32 inputs keep exact f32 matmuls.
    mm_dtype = jnp.bfloat16 if x.dtype == jnp.bfloat16 else jnp.float32

    emb_f32 = embedding_weight.astype(jnp.float32)
    e_sq = jnp.sum(emb_f32 * emb_f32, axis=-1)          # (K,), hoisted out of kernel
    emb_score = (-2.0 * emb_f32).T                      # (D, K), -2 & transpose folded
    if K_pad != K:                                      # padded codes: never selected
        emb_f32 = jnp.pad(emb_f32, ((0, K_pad - K), (0, 0)))
        emb_score = jnp.pad(emb_score, ((0, 0), (0, K_pad - K)))
        e_sq = jnp.pad(e_sq, (0, K_pad - K), constant_values=jnp.float32(1e30))
    e_sq = e_sq.reshape(1, K_pad)                       # stays f32 (sentinel-safe)
    emb_mm = emb_f32.astype(mm_dtype)
    emb_score = emb_score.astype(mm_dtype)

    x_flat = x.reshape(N, D)                            # free view, native dtype

    cap = _vmem_capacity_bytes()
    budget = max(32 << 20, int(0.70 * cap))
    vmem_limit = max(48 << 20, min(int(0.85 * cap), 112 << 20))
    TN = _pick_tile(N, D, K_pad,
                    x_bytes=x_flat.dtype.itemsize,
                    mm_bytes=jnp.dtype(mm_dtype).itemsize,
                    budget_bytes=budget)
    num_tiles = pl.cdiv(N, TN)
    mask_rows = (N % TN) != 0

    kernel = functools.partial(_quantizer_kernel, tn=TN, n_valid=N,
                               mask_rows=mask_rows, mm_dtype=mm_dtype)

    quant_flat, idx_flat, loss_tiles = pl.pallas_call(
        kernel,
        out_shape=(
            jax.ShapeDtypeStruct((N, D), x.dtype),            # native dtype, unpadded
            jax.ShapeDtypeStruct((N, 1), jnp.int32),
            jax.ShapeDtypeStruct((num_tiles, 1, 1), jnp.float32),
        ),
        grid_spec=pltpu.PrefetchScalarGridSpec(
            num_scalar_prefetch=0,
            grid=(num_tiles,),
            in_specs=[
                pl.BlockSpec((TN, D), lambda i: (i, 0)),              # x tile
                pl.BlockSpec((K_pad, D), lambda i: (0, 0),
                             pipeline_mode=pl.Buffered(1)),           # codebook (gather)
                pl.BlockSpec((D, K_pad), lambda i: (0, 0),
                             pipeline_mode=pl.Buffered(1)),           # (-2 e)^T (score)
                pl.BlockSpec((1, K_pad), lambda i: (0, 0),
                             pipeline_mode=pl.Buffered(1)),           # ||e||^2 row
            ],
            out_specs=[
                pl.BlockSpec((TN, D), lambda i: (i, 0)),              # quantized rows
                pl.BlockSpec((TN, 1), lambda i: (i, 0)),              # indices
                pl.BlockSpec((1, 1, 1), lambda i: (i, 0, 0)),         # per-tile loss
            ],
        ),
        compiler_params=pltpu.CompilerParams(
            dimension_semantics=("parallel",),                        # no grid carry
            vmem_limit_bytes=vmem_limit),
    )(x_flat, emb_mm, emb_score, e_sq)

    # commitment_loss == codebook_loss in forward value (detach only affects grads),
    # so quantize_loss = (1 + beta) * mean((quant - x)^2) over the real N*D.
    mse = jnp.sum(loss_tiles) / jnp.float32(N * D)
    quantize_loss = (1.0 + beta) * mse

    # straight-through: forward value of x + (quant - x).detach() is just quant
    quant_out = quant_flat.reshape(B, C, D)
    min_encoding_indices = idx_flat.reshape(B, C)
    return quant_out, quantize_loss, min_encoding_indices


if __name__ == "__main__":
    # small shapes consistent with the module's (B, C, D) input
    B, C, D = 2, 16, 32
    num_embeddings = 64
    beta = 0.25

    key = jax.random.PRNGKey(0)
    kx, ke = jax.random.split(key)
    x = jax.random.normal(kx, (B, C, D), dtype=jnp.float32)
    # nn.Embedding default init: N(0, 1)
    embedding_weight = jax.random.normal(ke, (num_embeddings, D), dtype=jnp.float32)

    quant_out, quantize_loss, indices = quantizer_forward(x, embedding_weight, beta=beta)
    jax.block_until_ready((quant_out, quantize_loss, indices))

    # pure-JAX reference check (exact elementwise distances, no MXU rounding)
    xf = x.reshape(-1, D)
    d2 = jnp.sum((xf[:, None, :] - embedding_weight[None, :, :]) ** 2, axis=-1)
    idx_ref = jnp.argmin(d2, axis=-1)
    q_ref = embedding_weight[idx_ref]
    loss_ref = (1.0 + beta) * jnp.mean((q_ref - xf) ** 2)
    assert indices.shape == (B, C)
    assert quant_out.shape == (B, C, D) and quant_out.dtype == x.dtype
    assert jnp.array_equal(indices.reshape(-1), idx_ref.astype(jnp.int32))
    assert jnp.allclose(quant_out.reshape(-1, D), q_ref, atol=1e-5)
    assert jnp.allclose(quantize_loss, loss_ref, atol=1e-5, rtol=1e-5)

    print("KERNEL_OK")
</pallas_src>

<mosaic_0001>
module attributes {stable_mosaic.version = 11 : i64} {
  func.func @_quantizer_kernel(%arg0: i32, %arg1: memref<32x32xf32, #tpu.memory_space<vmem>>, %arg2: memref<256x32xf32, #tpu.memory_space<vmem>>, %arg3: memref<32x256xf32, #tpu.memory_space<vmem>>, %arg4: memref<1x256xf32, #tpu.memory_space<vmem>>, %arg5: memref<32x32xf32, #tpu.memory_space<vmem>>, %arg6: memref<32x1xi32, #tpu.memory_space<vmem>>, %arg7: memref<1x1x1xf32, #tpu.memory_space<vmem>>) attributes {dimension_semantics = [#tpu.dimension_semantics<parallel>], iteration_bounds = array<i64: 1>, scalar_prefetch = 0 : i64, scratch_operands = 0 : i64, tpu.core_type = #tpu.core_type<tc>, window_params = [{transform_indices = @transform_0, window_bounds = array<i64: 32, 32>}, {pipeline_mode = #tpu.pipeline_mode<synchronous>, transform_indices = @transform_1, window_bounds = array<i64: 256, 32>}, {pipeline_mode = #tpu.pipeline_mode<synchronous>, transform_indices = @transform_2, window_bounds = array<i64: 32, 256>}, {pipeline_mode = #tpu.pipeline_mode<synchronous>, transform_indices = @transform_3, window_bounds = array<i64: 1, 256>}, {transform_indices = @transform_4, window_bounds = array<i64: 32, 32>}, {transform_indices = @transform_5, window_bounds = array<i64: 32, 1>}, {transform_indices = @transform_6, window_bounds = array<i64: 1, 1, 1>}]} {
    %c0 = arith.constant 0 : index
    %c0_0 = arith.constant 0 : index
    %0 = vector.load %arg1[%c0, %c0_0] : memref<32x32xf32, #tpu.memory_space<vmem>>, vector<32x32xf32>
    %c0_1 = arith.constant 0 : index
    %c0_2 = arith.constant 0 : index
    %1 = vector.load %arg3[%c0_1, %c0_2] : memref<32x256xf32, #tpu.memory_space<vmem>>, vector<32x256xf32>
    %cst = arith.constant dense<0.000000e+00> : vector<32x256xf32>
    %2 = tpu.matmul %0, %1, %cst {dimension_numbers = #tpu.dot_dimension_numbers<[1], [0], [0], [1], [0, 0, 1, 1], [], []>} : vector<32x32xf32>, vector<32x256xf32>, vector<32x256xf32> -> vector<32x256xf32>
    %c0_3 = arith.constant 0 : index
    %c0_4 = arith.constant 0 : index
    %3 = vector.load %arg4[%c0_3, %c0_4] : memref<1x256xf32, #tpu.memory_space<vmem>>, vector<1x256xf32>
    %4 = vector.broadcast %3 : vector<1x256xf32> to vector<32x256xf32>
    %5 = arith.addf %4, %2 : vector<32x256xf32>
    %cst_5 = arith.constant dense<0x7F800000> : vector<32xf32>
    %6 = vector.multi_reduction <minimumf>, %5, %cst_5 [1] : vector<32x256xf32> to vector<32xf32>
    %7 = vector.shape_cast %6 : vector<32xf32> to vector<32x1xf32>
    %8 = tpu.iota {dimensions = array<i32: 1>} : vector<32x256xi32>
    %9 = vector.broadcast %7 : vector<32x1xf32> to vector<32x256xf32>
    %10 = arith.cmpf oeq, %5, %9 : vector<32x256xf32>
    %c256_i32 = arith.constant 256 : i32
    %11 = vector.broadcast %c256_i32 : i32 to vector<32x256xi32>
    %12 = arith.select %10, %8, %11 : vector<32x256xi1>, vector<32x256xi32>
    %cst_6 = arith.constant dense<2147483647> : vector<32xi32>
    %13 = vector.multi_reduction <minsi>, %12, %cst_6 [1] : vector<32x256xi32> to vector<32xi32>
    %14 = vector.shape_cast %13 : vector<32xi32> to vector<32x1xi32>
    %c0_7 = arith.constant 0 : index
    %c0_8 = arith.constant 0 : index
    %15 = vector.load %arg6[%c0_7, %c0_8] : memref<32x1xi32, #tpu.memory_space<vmem>>, vector<32x1xi32>
    tpu.vector_store %arg6[%c0_7, %c0_8], %14 {strides = array<i32>} : memref<32x1xi32, #tpu.memory_space<vmem>>, vector<32x1xi32>,
    %16 = vector.broadcast %14 : vector<32x1xi32> to vector<32x256xi32>
    %17 = arith.cmpi eq, %8, %16 : vector<32x256xi32>
    %18 = arith.extui %17 : vector<32x256xi1> to vector<32x256xi32>
    %19 = arith.sitofp %18 : vector<32x256xi32> to vector<32x256xf32>
    %c0_9 = arith.constant 0 : index
    %c0_10 = arith.constant 0 : index
    %20 = vector.load %arg2[%c0_9, %c0_10] : memref<256x32xf32, #tpu.memory_space<vmem>>, vector<256x32xf32>
    %cst_11 = arith.constant dense<0.000000e+00> : vector<32x32xf32>
    %21 = tpu.matmul %19, %20, %cst_11 {dimension_numbers = #tpu.dot_dimension_numbers<[1], [0], [0], [1], [0, 0, 1, 1], [], []>} : vector<32x256xf32>, vector<256x32xf32>, vector<32x32xf32> -> vector<32x32xf32>
    %c0_12 = arith.constant 0 : index
    %c0_13 = arith.constant 0 : index
    %22 = vector.load %arg5[%c0_12, %c0_13] : memref<32x32xf32, #tpu.memory_space<vmem>>, vector<32x32xf32>
    tpu.vector_store %arg5[%c0_12, %c0_13], %21 {strides = array<i32>} : memref<32x32xf32, #tpu.memory_space<vmem>>, vector<32x32xf32>,
    %23 = arith.subf %21, %0 : vector<32x32xf32>
    %24 = arith.mulf %23, %23 : vector<32x32xf32>
    %25 = vector.shape_cast %24 : vector<32x32xf32> to vector<1x32x32xf32>
    %cst_14 = arith.constant dense<0.000000e+00> : vector<1xf32>
    %26 = vector.multi_reduction <add>, %25, %cst_14 [1, 2] : vector<1x32x32xf32> to vector<1xf32>
    %27 = vector.shape_cast %26 : vector<1xf32> to vector<1x1x1xf32>
    %28 = vector.extract %27[0, 0, 0] : f32 from vector<1x1x1xf32>
    %29 = vector.broadcast %28 : f32 to vector<1x1x1xf32>
    %c0_15 = arith.constant 0 : index
    %c0_16 = arith.constant 0 : index
    %c0_17 = arith.constant 0 : index
    %30 = vector.load %arg7[%c0_15, %c0_16, %c0_17] : memref<1x1x1xf32, #tpu.memory_space<vmem>>, vector<1x1x1xf32>
    tpu.vector_store %arg7[%c0_15, %c0_16, %c0_17], %29 {strides = array<i32>} : memref<1x1x1xf32, #tpu.memory_space<vmem>>, vector<1x1x1xf32>,
    return
  }
  func.func @transform_0(%arg0: i32) -> (i32, i32) {
    %c0_i32 = arith.constant 0 : i32
    %c0_i32_0 = arith.constant 0 : i32
    return %arg0, %c0_i32 : i32, i32
  }
  func.func @transform_1(%arg0: i32) -> (i32, i32) {
    %c0_i32 = arith.constant 0 : i32
    %c0_i32_0 = arith.constant 0 : i32
    %c0_i32_1 = arith.constant 0 : i32
    return %c0_i32, %c0_i32_0 : i32, i32
  }
  func.func @transform_2(%arg0: i32) -> (i32, i32) {
    %c0_i32 = arith.constant 0 : i32
    %c0_i32_0 = arith.constant 0 : i32
    %c0_i32_1 = arith.constant 0 : i32
    return %c0_i32, %c0_i32_0 : i32, i32
  }
  func.func @transform_3(%arg0: i32) -> (i32, i32) {
    %c0_i32 = arith.constant 0 : i32
    %c0_i32_0 = arith.constant 0 : i32
    %c0_i32_1 = arith.constant 0 : i32
    return %c0_i32, %c0_i32_0 : i32, i32
  }
  func.func @transform_4(%arg0: i32) -> (i32, i32) {
    %c0_i32 = arith.constant 0 : i32
    %c0_i32_0 = arith.constant 0 : i32
    return %arg0, %c0_i32 : i32, i32
  }
  func.func @transform_5(%arg0: i32) -> (i32, i32) {
    %c0_i32 = arith.constant 0 : i32
    %c0_i32_0 = arith.constant 0 : i32
    return %arg0, %c0_i32 : i32, i32
  }
  func.func @transform_6(%arg0: i32) -> (i32, i32, i32) {
    %c0_i32 = arith.constant 0 : i32
    %c0_i32_0 = arith.constant 0 : i32
    %c0_i32_1 = arith.constant 0 : i32
    return %arg0, %c0_i32, %c0_i32_0 : i32, i32, i32
  }
}

</mosaic_0001>

<llo_original>
// kernel: quantizer_forward.1
$region0: #{quantizer_forward.1}
  #allocation0 [shape = 'u32[]', space=smem, size = 0x4, offset = 0x4, fixed_abs, tag = 'smem constant byte address 0x4 - core index']
  #allocation1 [shape = 'u32[144,128]{1,0:T(1,128)}', space=vmem, size = 0x12000, scoped, tag = 'internal scratch']
  %s0 = inlined_call_operand.vmem [shape: f32[32,32], index: 0, kind: input, shape index: {}]
  %s1 = inlined_call_operand.vmem [shape: f32[256,32], index: 1, kind: input, shape index: {}]
  %s2 = inlined_call_operand.vmem [shape: f32[32,256], index: 2, kind: input, shape index: {}]
  %s3 = inlined_call_operand.vmem [shape: f32[1,256], index: 3, kind: input, shape index: {}]
  %s4 = inlined_call_operand.hbm [shape: f32[32,32], index: 4, kind: output, shape index: {0}]
  %s5 = inlined_call_operand.vmem [shape: s32[32,1], index: 5, kind: output, shape index: {1}]
  %s6 = inlined_call_operand.hbm [shape: f32[1,1,1], index: 6, kind: output, shape index: {2}]
  %7 = xla_tuple %s4, %s5, %s6
  %s8 = sld [smem:[#allocation0]]
  $region42: #{quantizer_forward.1} parent=0
    _
  %s10 = ssub.s32 1, %s8
  %s11 = scalar_select 0, %s10, %s8
  $region1: #{quantizer_forward.1} parent=0
    #allocation2 [shape = 'u8[16384]{0}', space=vmem, size = 0x4000, scoped, tag = 'output window, operand 0, single buffered']
    #allocation3 [shape = 's32[1]{0}', space=sflag, size = 0x4, scoped, tag = 'scoped memory for quantizer_forward.1']
    #allocation4 [shape = 'u8[512]{0}', space=vmem, size = 0x400, scoped, tag = 'output window, operand 2, single buffered']
    #allocation5 [shape = 's32[1]{0}', space=sflag, size = 0x4, scoped, tag = 'scoped memory for quantizer_forward.1']
    %12 = vsyncpa [#allocation3], 0
    %13 = vsyncpa [#allocation5], 0
    // Predicated region
    $region2: #{quantizer_forward.1} parent=1 // pred_check
      _
    $region3: #{quantizer_forward.1} parent=1 // pred_check_branch
      %15 = sbr.rel (0) target = $region5
    $region4: #{quantizer_forward.1} parent=1 // pred_region
      _
    $region5: #{quantizer_forward.1} parent=1 // pred_fallthru
      _
    // Predicated region
    $region6: #{quantizer_forward.1} parent=1 // pred_check
      _
    $region7: #{quantizer_forward.1} parent=1 // pred_check_branch
      %17 = sbr.rel (0) target = $region9
    $region8: #{quantizer_forward.1} parent=1 // pred_region
      _
    $region9: #{quantizer_forward.1} parent=1 // pred_fallthru
      _
    // Predicated region
    $region10: #{quantizer_forward.1} parent=1 // pred_check
      _
    $region11: #{quantizer_forward.1} parent=1 // pred_check_branch
      %19 = sbr.rel (0) target = $region13
    $region12: #{quantizer_forward.1} parent=1 // pred_region
      _
    $region13: #{quantizer_forward.1} parent=1 // pred_fallthru
      _
    // Predicated region
    $region14: #{quantizer_forward.1} parent=1 // pred_check
      _
    $region15: #{quantizer_forward.1} parent=1 // pred_check_branch
      %21 = sbr.rel (0) target = $region17
    $region16: #{quantizer_forward.1} parent=1 // pred_region
      _
    $region17: #{quantizer_forward.1} parent=1 // pred_fallthru
      _
    %v22 = vld [vmem:[%s0] sm:$0xff]
    %v23 = vld [vmem:[%s0 + $0x8] sm:$0xff]
    %v24 = vld [vmem:[%s0 + $0x10] sm:$0xff]
    %v25 = vld [vmem:[%s0 + $0x18] sm:$0xff]
    %v26 = vld [vmem:[%s2] sm:$0xff]
    %v27 = vld [vmem:[%s2 + $0x8] sm:$0xff]
    %v28 = vld [vmem:[%s2 + $0x10] sm:$0xff]
    %v29 = vld [vmem:[%s2 + $0x18] sm:$0xff]
    %v30 = vld [vmem:[%s2 + $0x20] sm:$0xff]
    %v31 = vld [vmem:[%s2 + $0x28] sm:$0xff]
    %v32 = vld [vmem:[%s2 + $0x30] sm:$0xff]
    %v33 = vld [vmem:[%s2 + $0x38] sm:$0xff]
    %vm34 = vcmask 261120
    %v36 = vsel %vm34, %v22, 0
    %v39 = vsel %vm34, %v23, 0
    %v42 = vsel %vm34, %v24, 0
    %v45 = vsel %vm34, %v25, 0
    %47 = vmatprep.subr.mxu0 %v27
    %48 = vmatpush1.msra.mxu0 %v26
    %49 = vmatprep.subr.mxu0 %v29
    %50 = vmatpush1.msra.mxu0 %v28
    %51 = vmatprep.subr.mxu0 %v31
    %52 = vmatpush1.msra.mxu0 %v30
    %53 = vmatprep.subr.mxu0 %v33
    %54 = vmatpush1.msra.mxu0 %v32
    %55 = vmatprep.subr.mxu0 0.0
    %56 = vmatpush1.msra.mxu0 0.0
    %57 = vmatprep.subr.mxu0 0.0
    %58 = vmatpush1.msra.mxu0 0.0
    %59 = vmatprep.subr.mxu0 0.0
    %60 = vmatpush1.msra.mxu0 0.0
    %61 = vmatprep.subr.mxu0 0.0
    %62 = vmatpush1.msra.mxu0 0.0
    %63 = vmatprep.subr.mxu0 0.0
    %64 = vmatpush1.msra.mxu0 0.0
    %65 = vmatprep.subr.mxu0 0.0
    %66 = vmatpush1.msra.mxu0 0.0
    %67 = vmatprep.subr.mxu0 0.0
    %68 = vmatpush1.msra.mxu0 0.0
    %69 = vmatprep.subr.mxu0 0.0
    %70 = vmatpush1.msra.mxu0 0.0
    %71 = vmatprep.subr.mxu0 0.0
    %72 = vmatpush1.msra.mxu0 0.0
    %73 = vmatprep.subr.mxu0 0.0
    %74 = vmatpush1.msra.mxu0 0.0
    %75 = vmatprep.subr.mxu0 0.0
    %76 = vmatpush1.msra.mxu0 0.0
    %77 = vmatprep.subr.mxu0 0.0
    %78 = vmatpush1.msra.mxu0 0.0
    %79 = vmatprep.subr.mxu0 0.0
    %80 = vmatpush1.msra.mxu0 0.0
    %81 = vmatprep.subr.mxu0 0.0
    %82 = vmatpush1.msra.mxu0 0.0
    %83 = vmatprep.subr.mxu0 0.0
    %84 = vmatpush1.msra.mxu0 0.0
    %85 = vmatprep.subr.mxu0 0.0
    %86 = vmatpush1.msra.mxu0 0.0
    %87 = vmatprep.subr.mxu0 0.0
    %88 = vmatpush1.msra.mxu0 0.0
    %89 = vmatprep.subr.mxu0 0.0
    %90 = vmatpush1.msra.mxu0 0.0
    %91 = vmatprep.subr.mxu0 0.0
    %92 = vmatpush1.msra.mxu0 0.0
    %93 = vmatprep.subr.mxu0 0.0
    %94 = vmatpush1.msra.mxu0 0.0
    %95 = vmatprep.subr.mxu0 0.0
    %96 = vmatpush1.msra.mxu0 0.0
    %97 = vmatprep.subr.mxu0 0.0
    %98 = vmatpush1.msra.mxu0 0.0
    %99 = vmatprep.subr.mxu0 0.0
    %100 = vmatpush1.msra.mxu0 0.0
    %101 = vmatprep.subr.mxu0 0.0
    %102 = vmatpush1.msra.mxu0 0.0
    %103 = vmatprep.subr.mxu0 0.0
    %104 = vmatpush1.msra.mxu0 0.0
    %105 = vmatprep.subr.mxu0 0.0
    %106 = vmatpush1.msra.mxu0 0.0
    %107 = vmatprep.subr.mxu0 0.0
    %108 = vmatpush1.msra.mxu0 0.0
    %109 = vmatprep.subr.mxu0 0.0
    %110 = vmatpush1.msra.mxu0 0.0
    %111 = vmatprep.mubr.f32.mxu0 0.0
    %112 = vmatmul.mubr.f32.gmra.mrb[0].mxu0 %v36
    %v113 = vpop.f32.mrb[0].mxu0
    %v114 = vadd.f32 0.0, %v113
    %v115 = vpop.f32.mrb[0].mxu0
    %v116 = vadd.f32 0.0, %v115
    %117 = vmatprep.mubr.f32.mxu0 0.0
    %118 = vmatmul.mubr.f32.gmra.mrb[0].mxu0 %v39
    %v119 = vpop.f32.mrb[0].mxu0
    %v120 = vadd.f32 0.0, %v119
    %v121 = vpop.f32.mrb[0].mxu0
    %v122 = vadd.f32 0.0, %v121
    %123 = vmatprep.mubr.f32.mxu0 0.0
    %124 = vmatmul.mubr.f32.gmra.mrb[0].mxu0 %v42
    %v125 = vpop.f32.mrb[0].mxu0
    %v126 = vadd.f32 0.0, %v125
    %v127 = vpop.f32.mrb[0].mxu0
    %v128 = vadd.f32 0.0, %v127
    %129 = vmatprep.mubr.f32.mxu0 0.0
    %130 = vmatmul.mubr.f32.gmra.mrb[0].mxu0 %v45
    %v131 = vpop.f32.mrb[0].mxu0
    %v132 = vadd.f32 0.0, %v131
    %v133 = vpop.f32.mrb[0].mxu0
    %v134 = vadd.f32 0.0, %v133
    %135 = vdwg.mxu0
    %v136 = vld [vmem:[%s3] sm:$0x3]
    %v138 = vlaneseq
    %v139 = vshrl.u32 %v138, 7
    %v140 = vsub.s32 0, %v139
    %v141 = vrot.slane %v136, %v140
    %v142 = vlaneseq
    %v143 = vshrl.u32 %v142, 7
    %v144 = vsub.s32 1, %v143
    %v145 = vrot.slane %v136, %v144
    %v148 = vadd.f32 %v141, %v114
    %v149 = vadd.f32 %v145, %v116
    %v150 = vadd.f32 %v141, %v120
    %v151 = vadd.f32 %v145, %v122
    %v152 = vadd.f32 %v141, %v126
    %v153 = vadd.f32 %v145, %v128
    %v154 = vadd.f32 %v141, %v132
    %v155 = vadd.f32 %v145, %v134
    %v156 = vmin.f32 %v148, %v149
    %157 = vmin.xlane.f32.xlu0 %v156
    %v158 = vpop.xlane.xlu0 %157
    %v159 = vmin.f32 %v150, %v151
    %160 = vmin.xlane.f32.xlu0 %v159
    %v161 = vpop.xlane.xlu0 %160
    %v162 = vmin.f32 %v152, %v153
    %163 = vmin.xlane.f32.xlu0 %v162
    %v164 = vpop.xlane.xlu0 %163
    %v165 = vmin.f32 %v154, %v155
    %166 = vmin.xlane.f32.xlu0 %v165
    %v167 = vpop.xlane.xlu0 %166
    %v168 = vlaneseq
    %v169 = vand.u32 %v168, 127
    %v170 = vadd.s32 %v169, 128
    %vm171 = vcmp.eq.f32.partialorder %v148, %v158
    %vm172 = vcmp.eq.f32.partialorder %v149, %v158
    %vm173 = vcmp.eq.f32.partialorder %v150, %v161
    %vm174 = vcmp.eq.f32.partialorder %v151, %v161
    %vm175 = vcmp.eq.f32.partialorder %v152, %v164
    %vm176 = vcmp.eq.f32.partialorder %v153, %v164
    %vm177 = vcmp.eq.f32.partialorder %v154, %v167
    %vm178 = vcmp.eq.f32.partialorder %v155, %v167
    %v179 = vsel %vm171, %v169, 256
    %v180 = vsel %vm172, %v170, 256
    %v181 = vsel %vm173, %v169, 256
    %v182 = vsel %vm174, %v170, 256
    %v183 = vsel %vm175, %v169, 256
    %v184 = vsel %vm176, %v170, 256
    %v185 = vsel %vm177, %v169, 256
    %v186 = vsel %vm178, %v170, 256
    %vm187 = vcmp.lt.s32.totalorder %v179, %v180
    %v188 = vsel %vm187, %v179, %v180
    %v189 = vand.u32 %v188, 65535
    %v190 = vshra.s32 %v188, 16
    %v191 = vcvt.s32.f32 %v189
    %v192 = vcvt.s32.f32 %v190
    %193 = vmin.xlane.f32.xlu0 %v192
    %v194 = vpop.xlane.xlu0 %193
    %vm195 = vcmp.eq.f32.partialorder %v192, %v194
    %v196 = vsel %vm195, %v191, inf
    %197 = vmin.xlane.f32.xlu0 %v196
    %v198 = vpop.xlane.xlu0 %197
    %v199 = vcvt.f32.s32 %v198
    %v200 = vcvt.f32.s32 %v194
    %v201 = vshll.u32 %v200, 16
    %v202 = vadd.s32 %v201, %v199
    %vm203 = vcmp.lt.s32.totalorder %v181, %v182
    %v204 = vsel %vm203, %v181, %v182
    %v205 = vand.u32 %v204, 65535
    %v206 = vshra.s32 %v204, 16
    %v207 = vcvt.s32.f32 %v205
    %v208 = vcvt.s32.f32 %v206
    %209 = vmin.xlane.f32.xlu0 %v208
    %v210 = vpop.xlane.xlu0 %209
    %vm211 = vcmp.eq.f32.partialorder %v208, %v210
    %v212 = vsel %vm211, %v207, inf
    %213 = vmin.xlane.f32.xlu0 %v212
    %v214 = vpop.xlane.xlu0 %213
    %v215 = vcvt.f32.s32 %v214
    %v216 = vcvt.f32.s32 %v210
    %v217 = vshll.u32 %v216, 16
    %v218 = vadd.s32 %v217, %v215
    %vm219 = vcmp.lt.s32.totalorder %v183, %v184
    %v220 = vsel %vm219, %v183, %v184
    %v221 = vand.u32 %v220, 65535
    %v222 = vshra.s32 %v220, 16
    %v223 = vcvt.s32.f32 %v221
    %v224 = vcvt.s32.f32 %v222
    %225 = vmin.xlane.f32.xlu0 %v224
    %v226 = vpop.xlane.xlu0 %225
    %vm227 = vcmp.eq.f32.partialorder %v224, %v226
    %v228 = vsel %vm227, %v223, inf
    %229 = vmin.xlane.f32.xlu0 %v228
    %v230 = vpop.xlane.xlu0 %229
    %v231 = vcvt.f32.s32 %v230
    %v232 = vcvt.f32.s32 %v226
    %v233 = vshll.u32 %v232, 16
    %v234 = vadd.s32 %v233, %v231
    %vm235 = vcmp.lt.s32.totalorder %v185, %v186
    %v236 = vsel %vm235, %v185, %v186
    %v237 = vand.u32 %v236, 65535
    %v238 = vshra.s32 %v236, 16
    %v239 = vcvt.s32.f32 %v237
    %v240 = vcvt.s32.f32 %v238
    %241 = vmin.xlane.f32.xlu0 %v240
    %v242 = vpop.xlane.xlu0 %241
    %vm243 = vcmp.eq.f32.partialorder %v240, %v242
    %v244 = vsel %vm243, %v239, inf
    %245 = vmin.xlane.f32.xlu0 %v244
    %v246 = vpop.xlane.xlu0 %245
    %v247 = vcvt.f32.s32 %v246
    %v248 = vcvt.f32.s32 %v242
    %v249 = vshll.u32 %v248, 16
    %v250 = vadd.s32 %v249, %v247
    %vm251 = vcmask 7168
    %252 = vst.msk [vmem:[%s5] sm:$0xff] %vm251, %v202
    %253 = vst.msk [vmem:[%s5 + $0x8] sm:$0xff] %vm251, %v218
    %254 = vst.msk [vmem:[%s5 + $0x10] sm:$0xff] %vm251, %v234
    %255 = vst.msk [vmem:[%s5 + $0x18] sm:$0xff] %vm251, %v250
    %vm256 = vcmp.eq.s32.totalorder %v169, %v202
    %vm257 = vcmp.eq.s32.totalorder %v170, %v202
    %vm258 = vcmp.eq.s32.totalorder %v169, %v218
    %vm259 = vcmp.eq.s32.totalorder %v170, %v218
    %vm260 = vcmp.eq.s32.totalorder %v169, %v234
    %vm261 = vcmp.eq.s32.totalorder %v170, %v234
    %vm262 = vcmp.eq.s32.totalorder %v169, %v250
    %vm263 = vcmp.eq.s32.totalorder %v170, %v250
    %v264 = vsel %vm256, 1, 0
    %v265 = vsel %vm257, 1, 0
    %v266 = vsel %vm258, 1, 0
    %v267 = vsel %vm259, 1, 0
    %v268 = vsel %vm260, 1, 0
    %v269 = vsel %vm261, 1, 0
    %v270 = vsel %vm262, 1, 0
    %v271 = vsel %vm263, 1, 0
    %v272 = vcvt.s32.f32 %v264
    %v273 = vcvt.s32.f32 %v265
    %v274 = vcvt.s32.f32 %v266
    %v275 = vcvt.s32.f32 %v267
    %v276 = vcvt.s32.f32 %v268
    %v277 = vcvt.s32.f32 %v269
    %v278 = vcvt.s32.f32 %v270
    %v279 = vcvt.s32.f32 %v271
    %v280 = vld [vmem:[%s1] sm:$0xff]
    %v281 = vld [vmem:[%s1 + $0x8] sm:$0xff]
    %v282 = vld [vmem:[%s1 + $0x10] sm:$0xff]
    %v283 = vld [vmem:[%s1 + $0x18] sm:$0xff]
    %v284 = vld [vmem:[%s1 + $0x20] sm:$0xff]
    %v285 = vld [vmem:[%s1 + $0x28] sm:$0xff]
    %v286 = vld [vmem:[%s1 + $0x30] sm:$0xff]
    %v287 = vld [vmem:[%s1 + $0x38] sm:$0xff]
    %v288 = vld [vmem:[%s1 + $0x40] sm:$0xff]
    %v289 = vld [vmem:[%s1 + $0x48] sm:$0xff]
    %v290 = vld [vmem:[%s1 + $0x50] sm:$0xff]
    %v291 = vld [vmem:[%s1 + $0x58] sm:$0xff]
    %v292 = vld [vmem:[%s1 + $0x60] sm:$0xff]
    %v293 = vld [vmem:[%s1 + $0x68] sm:$0xff]
    %v294 = vld [vmem:[%s1 + $0x70] sm:$0xff]
    %v295 = vld [vmem:[%s1 + $0x78] sm:$0xff]
    %v296 = vld [vmem:[%s1 + $0x80] sm:$0xff]
    %v297 = vld [vmem:[%s1 + $0x88] sm:$0xff]
    %v298 = vld [vmem:[%s1 + $0x90] sm:$0xff]
    %v299 = vld [vmem:[%s1 + $0x98] sm:$0xff]
    %v300 = vld [vmem:[%s1 + $0xa0] sm:$0xff]
    %v301 = vld [vmem:[%s1 + $0xa8] sm:$0xff]
    %v302 = vld [vmem:[%s1 + $0xb0] sm:$0xff]
    %v303 = vld [vmem:[%s1 + $0xb8] sm:$0xff]
    %v304 = vld [vmem:[%s1 + $0xc0] sm:$0xff]
    %v305 = vld [vmem:[%s1 + $0xc8] sm:$0xff]
    %v306 = vld [vmem:[%s1 + $0xd0] sm:$0xff]
    %v307 = vld [vmem:[%s1 + $0xd8] sm:$0xff]
    %v308 = vld [vmem:[%s1 + $0xe0] sm:$0xff]
    %v309 = vld [vmem:[%s1 + $0xe8] sm:$0xff]
    %v310 = vld [vmem:[%s1 + $0xf0] sm:$0xff]
    %v311 = vld [vmem:[%s1 + $0xf8] sm:$0xff]
    %312 = vmatprep.subr.mxu0 0.0
    %313 = vmatpush1.msra.mxu0 %v280
    %314 = vmatprep.subr.mxu0 0.0
    %315 = vmatpush1.msra.mxu0 %v281
    %316 = vmatprep.subr.mxu0 0.0
    %317 = vmatpush1.msra.mxu0 %v282
    %318 = vmatprep.subr.mxu0 0.0
    %319 = vmatpush1.msra.mxu0 %v283
    %320 = vmatprep.subr.mxu0 0.0
    %321 = vmatpush1.msra.mxu0 %v284
    %322 = vmatprep.subr.mxu0 0.0
    %323 = vmatpush1.msra.mxu0 %v285
    %324 = vmatprep.subr.mxu0 0.0
    %325 = vmatpush1.msra.mxu0 %v286
    %326 = vmatprep.subr.mxu0 0.0
    %327 = vmatpush1.msra.mxu0 %v287
    %328 = vmatprep.subr.mxu0 0.0
    %329 = vmatpush1.msra.mxu0 %v288
    %330 = vmatprep.subr.mxu0 0.0
    %331 = vmatpush1.msra.mxu0 %v289
    %332 = vmatprep.subr.mxu0 0.0
    %333 = vmatpush1.msra.mxu0 %v290
    %334 = vmatprep.subr.mxu0 0.0
    %335 = vmatpush1.msra.mxu0 %v291
    %336 = vmatprep.subr.mxu0 0.0
    %337 = vmatpush1.msra.mxu0 %v292
    %338 = vmatprep.subr.mxu0 0.0
    %339 = vmatpush1.msra.mxu0 %v293
    %340 = vmatprep.subr.mxu0 0.0
    %341 = vmatpush1.msra.mxu0 %v294
    %342 = vmatprep.subr.mxu0 0.0
    %343 = vmatpush1.msra.mxu0 %v295
    %344 = vmatprep.subr.mxu0 0.0
    %345 = vmatpush1.msra.mxu0 %v296
    %346 = vmatprep.subr.mxu0 0.0
    %347 = vmatpush1.msra.mxu0 %v297
    %348 = vmatprep.subr.mxu0 0.0
    %349 = vmatpush1.msra.mxu0 %v298
    %350 = vmatprep.subr.mxu0 0.0
    %351 = vmatpush1.msra.mxu0 %v299
    %352 = vmatprep.subr.mxu0 0.0
    %353 = vmatpush1.msra.mxu0 %v300
    %354 = vmatprep.subr.mxu0 0.0
    %355 = vmatpush1.msra.mxu0 %v301
    %356 = vmatprep.subr.mxu0 0.0
    %357 = vmatpush1.msra.mxu0 %v302
    %358 = vmatprep.subr.mxu0 0.0
    %359 = vmatpush1.msra.mxu0 %v303
    %360 = vmatprep.subr.mxu0 0.0
    %361 = vmatpush1.msra.mxu0 %v304
    %362 = vmatprep.subr.mxu0 0.0
    %363 = vmatpush1.msra.mxu0 %v305
    %364 = vmatprep.subr.mxu0 0.0
    %365 = vmatpush1.msra.mxu0 %v306
    %366 = vmatprep.subr.mxu0 0.0
    %367 = vmatpush1.msra.mxu0 %v307
    %368 = vmatprep.subr.mxu0 0.0
    %369 = vmatpush1.msra.mxu0 %v308
    %370 = vmatprep.subr.mxu0 0.0
    %371 = vmatpush1.msra.mxu0 %v309
    %372 = vmatprep.subr.mxu0 0.0
    %373 = vmatpush1.msra.mxu0 %v310
    %374 = vmatprep.subr.mxu0 0.0
    %375 = vmatpush1.msra.mxu0 %v311
    %376 = vmatprep.mubr.f32.mxu0 %v273
    %377 = vmatmul.mubr.f32.gmra.mrb[0].mxu0 %v272
    %v378 = vpop.f32.mrb[0].mxu0
    %v379 = vadd.f32 0.0, %v378
    %v380 = vpop.f32.mrb[0].mxu0
    %381 = vmatprep.mubr.f32.mxu0 %v275
    %382 = vmatmul.mubr.f32.gmra.mrb[0].mxu0 %v274
    %v383 = vpop.f32.mrb[0].mxu0
    %v384 = vadd.f32 0.0, %v383
    %v385 = vpop.f32.mrb[0].mxu0
    %386 = vmatprep.mubr.f32.mxu0 %v277
    %387 = vmatmul.mubr.f32.gmra.mrb[0].mxu0 %v276
    %v388 = vpop.f32.mrb[0].mxu0
    %v389 = vadd.f32 0.0, %v388
    %v390 = vpop.f32.mrb[0].mxu0
    %391 = vmatprep.mubr.f32.mxu0 %v279
    %392 = vmatmul.mubr.f32.gmra.mrb[0].mxu0 %v278
    %v393 = vpop.f32.mrb[0].mxu0
    %v394 = vadd.f32 0.0, %v393
    %v395 = vpop.f32.mrb[0].mxu0
    %396 = vdwg.mxu0
    %397 = vst.msk [vmem:[#allocation2] sm:$0xff] %vm34, %v379
    %398 = vst.msk [vmem:[#allocation2 + $0x8] sm:$0xff] %vm34, %v384
    %399 = vst.msk [vmem:[#allocation2 + $0x10] sm:$0xff] %vm34, %v389
    %400 = vst.msk [vmem:[#allocation2 + $0x18] sm:$0xff] %vm34, %v394
    %v401 = vsub.f32 %v379, %v22
    %v402 = vsub.f32 %v384, %v23
    %v403 = vsub.f32 %v389, %v24
    %v404 = vsub.f32 %v394, %v25
    %v405 = vmul.f32 %v401, %v401
    %v406 = vmul.f32 %v402, %v402
    %v407 = vmul.f32 %v403, %v403
    %v408 = vmul.f32 %v404, %v404
    %v409 = vsel %vm34, %v405, 0.0
    %v410 = vsel %vm34, %v406, 0.0
    %v411 = vadd.f32 %v409, %v410
    %v412 = vsel %vm34, %v407, 0.0
    %v413 = vadd.f32 %v411, %v412
    %v414 = vsel %vm34, %v408, 0.0
    %v415 = vadd.f32 %v413, %v414
    %416 = vadd.xlane.f32.xlu0 %v415
    %v417 = vpop.xlane.xlu0 %416
    %v418 = vrot.slane %v417, 4
    %v419 = vadd.f32 %v417, %v418
    %v420 = vrot.slane %v419, 2
    %v421 = vadd.f32 %v419, %v420
    %v422 = vrot.slane %v421, 1
    %v423 = vadd.f32 %v421, %v422
    %s424 = vtos %v423
    %v425 = vstv %s424
    %vm426 = vcmask 0
    %427 = vst.msk [vmem:[#allocation4] sm:$0x1] %vm426, %v425
    // Predicated region
    $region18: #{quantizer_forward.1} parent=1 // pred_check
      _
    $region19: #{quantizer_forward.1} parent=1 // pred_check_branch
      %429 = sbr.rel (0) target = $region21
    $region20: #{quantizer_forward.1} parent=1 // pred_region
      %s431 = ssub.s32 512, 512
      %432 = vsyncadd [#allocation3], %s431
      %s433 = sshll.u32 [#allocation2], 4
      %s434 = int_to_ptr.vmem [resolvable:$true] %s433
      %439 = dma.vmem_to_hbm [thread:$0]  %s434, 512, %s4, [#allocation3], 128, 128, 8
    $region21: #{quantizer_forward.1} parent=1 // pred_fallthru
      _
    // Predicated region
    $region22: #{quantizer_forward.1} parent=1 // pred_check
      _
    $region23: #{quantizer_forward.1} parent=1 // pred_check_branch
      %441 = sbr.rel (0) target = $region25
    $region24: #{quantizer_forward.1} parent=1 // pred_region
      _
    $region25: #{quantizer_forward.1} parent=1 // pred_fallthru
      _
    // Predicated region
    $region26: #{quantizer_forward.1} parent=1 // pred_check
      _
    $region27: #{quantizer_forward.1} parent=1 // pred_check_branch
      %443 = sbr.rel (0) target = $region29
    $region28: #{quantizer_forward.1} parent=1 // pred_region
      %s445 = ssub.s32 16, 16
      %446 = vsyncadd [#allocation5], %s445
      %s448 = sshll.u32 [#allocation4], 4
      %s449 = int_to_ptr.vmem [resolvable:$true] %s448
      %451 = dma.vmem_to_hbm [thread:$0]  %s449, 16, %s6, [#allocation5]
    $region29: #{quantizer_forward.1} parent=1 // pred_fallthru
      _
    // Predicated region
    $region30: #{quantizer_forward.1} parent=1 // pred_check
      _
    $region31: #{quantizer_forward.1} parent=1 // pred_check_branch
      %453 = sbr.rel (0) target = $region33
    $region32: #{quantizer_forward.1} parent=1 // pred_region
      %454 = dma.done [#allocation3], 512
    $region33: #{quantizer_forward.1} parent=1 // pred_fallthru
      _
    // Predicated region
    $region34: #{quantizer_forward.1} parent=1 // pred_check
      _
    $region35: #{quantizer_forward.1} parent=1 // pred_check_branch
      %456 = sbr.rel (0) target = $region37
    $region36: #{quantizer_forward.1} parent=1 // pred_region
      _
    $region37: #{quantizer_forward.1} parent=1 // pred_fallthru
      _
    // Predicated region
    $region38: #{quantizer_forward.1} parent=1 // pred_check
      _
    $region39: #{quantizer_forward.1} parent=1 // pred_check_branch
      %458 = sbr.rel (0) target = $region41
    $region40: #{quantizer_forward.1} parent=1 // pred_region
      %459 = dma.done [#allocation5], 16
    $region41: #{quantizer_forward.1} parent=1 // pred_fallthru
      _
    %460 = vsyncpa [#allocation3], 1
    %461 = vsyncpa [#allocation5], 1

</llo_original>
